<compile_context>
chip_gen: v7x
topology: tpu7x:2x2x1
jax: 0.10.0
libtpu: 0.0.40
codegen_flags: <defaults>
</compile_context>

<pallas_src>
import functools

import jax
import jax.numpy as jnp
from jax.experimental import pallas as pl
from jax.experimental.pallas import tpu as pltpu


def _round_up(x, m):
    return ((x + m - 1) // m) * m


def _layer(x, w_bf16, b_row, g_row, beta_row, alpha, inv_h, eps=1e-5):
    """One residual block in f32: x + LN(PReLU(x @ W + b)).  Dropout == identity.

    Padded hidden lanes of W / b / gamma / beta are zero, so padded lanes of y are
    exactly 0: plain lane sums already equal sums over the valid lanes, and
    gamma/beta re-zero the padded lanes after normalization (no lane mask needed).
    """
    y = jnp.dot(x.astype(jnp.bfloat16), w_bf16, preferred_element_type=jnp.float32)
    y = y + b_row                                           # (T,Hp) + (1,Hp)
    y = jnp.where(y >= 0.0, y, alpha * y)                   # PReLU (shared slope)
    mean = jnp.sum(y, axis=-1, keepdims=True) * inv_h
    var = jnp.sum(y * y, axis=-1, keepdims=True) * inv_h - mean * mean
    var = jnp.maximum(var, 0.0)                             # guard cancellation
    y = (y - mean) * jax.lax.rsqrt(var + eps)
    y = y * g_row + beta_row                                # padded lanes -> 0
    return x + y                                            # residual


def _resident_kernel(alpha_ref, x_ref, w_ref, b_ref, g_ref, beta_ref, out_ref,
                     *, h_valid):
    """All layer weights VMEM-resident; small static L -> unrolled layer loop.

    alpha_ref : SMEM (L,)            PReLU shared slope per layer
    x_ref     : VMEM (T, Hp)         input rows
    w_ref     : VMEM (L, Hp, Hp)     bf16 weights, (in, out) layout, zero-padded
    b_ref     : VMEM (L, 1, Hp)      f32 Linear bias
    g_ref     : VMEM (L, 1, Hp)      f32 LayerNorm weight
    beta_ref  : VMEM (L, 1, Hp)      f32 LayerNorm bias
    out_ref   : VMEM (T, Hp)         output rows
    """
    x = x_ref[...].astype(jnp.float32)
    inv_h = jnp.float32(1.0 / h_valid)
    num_layers = w_ref.shape[0]
    for l in range(num_layers):
        x = _layer(x, w_ref[l], b_ref[l], g_ref[l], beta_ref[l],
                   alpha_ref[l], inv_h)
    out_ref[...] = x.astype(out_ref.dtype)


def _streaming_kernel(alpha_ref, x_ref, w_ref, b_ref, g_ref, beta_ref, out_ref,
                      acc_ref, *, h_valid):
    """Weights streamed one layer per grid step along a trailing 'arbitrary' axis.

    w_ref/b_ref/g_ref/beta_ref hold only layer l's block; acc_ref carries the f32
    row tile across layers; out_ref is written once at the last layer.
    """
    l = pl.program_id(1)

    @pl.when(l == 0)
    def _():
        acc_ref[...] = x_ref[...].astype(jnp.float32)

    inv_h = jnp.float32(1.0 / h_valid)
    acc_ref[...] = _layer(acc_ref[...], w_ref[0], b_ref[0], g_ref[0], beta_ref[0],
                          alpha_ref[l], inv_h)

    @pl.when(l == pl.num_programs(1) - 1)
    def _():
        out_ref[...] = acc_ref[...].astype(out_ref.dtype)


def _vmem_capacity_bytes():
    try:
        return int(pltpu.get_tpu_info().vmem_capacity_bytes)
    except Exception:
        return 64 << 20  # conservative (v7x per-core VMEM)


def mlp_encoder(x_dict, params, *, tile_n=None, io_dtype=None, force_mode=None,
                interpret=False):
    """params = (alpha (L,), w_t (L,H,H) in (in,out) layout, b (L,H), gamma (L,H), beta (L,H)).

    Returns {'hidden': [N, H]} matching MLPEncoder.forward in eval mode.
    io_dtype: optionally stream x / out in a narrower dtype (e.g. jnp.bfloat16) to
    halve HBM traffic on v5e/v6e; the in-kernel residual chain stays f32.
    """
    x = x_dict["h"]
    alpha, w_t, b, gamma, beta = params
    n, h = x.shape
    num_layers = w_t.shape[0]

    # ---- lane-dense hidden dim: pad H up to a multiple of 128 ----
    hp = max(128, _round_up(h, 128))
    pad_h = hp - h
    if pad_h:
        x_p = jnp.pad(x, ((0, 0), (0, pad_h)))
        w_p = jnp.pad(w_t, ((0, 0), (0, pad_h), (0, pad_h)))
        b_p = jnp.pad(b, ((0, 0), (0, pad_h)))
        g_p = jnp.pad(gamma, ((0, 0), (0, pad_h)))
        beta_p = jnp.pad(beta, ((0, 0), (0, pad_h)))
    else:
        x_p, w_p, b_p, g_p, beta_p = x, w_t, b, gamma, beta

    # bf16 matmul operands (f32 accumulation in-kernel); vector params in f32,
    # reshaped to (L, 1, Hp) so per-layer blocks satisfy the (sublane, lane) rule.
    w_p = w_p.astype(jnp.bfloat16)
    b_p = b_p.astype(jnp.float32).reshape(num_layers, 1, hp)
    g_p = g_p.astype(jnp.float32).reshape(num_layers, 1, hp)
    beta_p = beta_p.astype(jnp.float32).reshape(num_layers, 1, hp)
    alpha = alpha.astype(jnp.float32)

    out_dtype = io_dtype if io_dtype is not None else x.dtype
    if io_dtype is not None:
        x_p = x_p.astype(io_dtype)
    in_itemsize = jnp.dtype(x_p.dtype).itemsize
    out_itemsize = jnp.dtype(out_dtype).itemsize
    sublane = 16 if min(in_itemsize, out_itemsize) == 2 else 8

    # ---- generation-aware VMEM budget ----
    vmem_cap = _vmem_capacity_bytes()
    vmem_limit = max(int(0.75 * vmem_cap), 16 << 20)

    w_bytes = num_layers * hp * hp * 2
    vec_bytes = 3 * num_layers * 8 * hp * 4          # (L,1,Hp) padded to 8 sublanes
    resident = (w_bytes + vec_bytes) <= int(0.5 * vmem_limit)
    if force_mode == "resident":
        resident = True
    elif force_mode == "stream":
        resident = False

    # ---- N tiling: multiple of the sublane width, capped so the grid has >=2 steps
    #      (keeps both v7x TensorCores busy and preserves DMA/compute overlap). ----
    if tile_n is None:
        tile_n = 512 if vmem_cap > (64 << 20) else 256
    tile_n = min(tile_n, _round_up(n, sublane))
    tile_n = min(tile_n, _round_up(max(1, pl.cdiv(n, 4)), sublane))
    tile_n = max(sublane, _round_up(tile_n, sublane))

    def _tile_vmem(t):
        io = 2 * t * hp * in_itemsize + 2 * t * hp * out_itemsize   # double-buffered x/out
        interm = 5 * t * hp * 4                                     # live f32 intermediates
        if resident:
            return w_bytes + vec_bytes + io + interm                # params single-buffered
        # streaming: per-layer W double-buffered + small vec params + acc scratch
        return 2 * hp * hp * 2 + 2 * 3 * 8 * hp * 4 + io + interm + t * hp * 4

    while tile_n > sublane and _tile_vmem(tile_n) > int(0.85 * vmem_limit):
        tile_n = max(sublane, _round_up(tile_n // 2, sublane))

    n_tiles = pl.cdiv(n, tile_n)

    params_hbm = w_bytes + 3 * num_layers * hp * 4
    if not resident:
        params_hbm *= n_tiles
    cost = pl.CostEstimate(
        flops=2 * num_layers * n * hp * hp,
        transcendentals=num_layers * n,                      # one rsqrt per row per layer
        bytes_accessed=int(params_hbm + n * hp * (in_itemsize + out_itemsize)),
    )
    compiler_params_common = dict(vmem_limit_bytes=int(vmem_limit))

    if resident:
        kernel = functools.partial(_resident_kernel, h_valid=h)
        out_p = pl.pallas_call(
            kernel,
            out_shape=jax.ShapeDtypeStruct((n, hp), out_dtype),
            grid=(n_tiles,),
            in_specs=[
                pl.BlockSpec(memory_space=pltpu.MemorySpace.SMEM),            # alpha
                pl.BlockSpec((tile_n, hp), lambda i: (i, 0)),                 # x tile
                pl.BlockSpec((num_layers, hp, hp), lambda i: (0, 0, 0),
                             pipeline_mode=pl.Buffered(1)),                   # W resident, 1 buf
                pl.BlockSpec((num_layers, 1, hp), lambda i: (0, 0, 0),
                             pipeline_mode=pl.Buffered(1)),                   # bias
                pl.BlockSpec((num_layers, 1, hp), lambda i: (0, 0, 0),
                             pipeline_mode=pl.Buffered(1)),                   # gamma
                pl.BlockSpec((num_layers, 1, hp), lambda i: (0, 0, 0),
                             pipeline_mode=pl.Buffered(1)),                   # beta
            ],
            out_specs=pl.BlockSpec((tile_n, hp), lambda i: (i, 0)),
            compiler_params=pltpu.CompilerParams(
                dimension_semantics=("parallel",), **compiler_params_common),
            cost_estimate=cost,
            interpret=interpret,
        )(alpha, x_p, w_p, b_p, g_p, beta_p)
    else:
        kernel = functools.partial(_streaming_kernel, h_valid=h)
        out_p = pl.pallas_call(
            kernel,
            out_shape=jax.ShapeDtypeStruct((n, hp), out_dtype),
            grid=(n_tiles, num_layers),
            in_specs=[
                pl.BlockSpec(memory_space=pltpu.MemorySpace.SMEM),            # alpha
                pl.BlockSpec((tile_n, hp), lambda i, l: (i, 0)),              # x (fetched per i)
                pl.BlockSpec((1, hp, hp), lambda i, l: (l, 0, 0)),            # W streamed per layer
                pl.BlockSpec((1, 1, hp), lambda i, l: (l, 0, 0)),             # bias
                pl.BlockSpec((1, 1, hp), lambda i, l: (l, 0, 0)),             # gamma
                pl.BlockSpec((1, 1, hp), lambda i, l: (l, 0, 0)),             # beta
            ],
            out_specs=pl.BlockSpec((tile_n, hp), lambda i, l: (i, 0)),
            scratch_shapes=[pltpu.VMEM((tile_n, hp), jnp.float32)],
            compiler_params=pltpu.CompilerParams(
                dimension_semantics=("parallel", "arbitrary"),
                **compiler_params_common),
            cost_estimate=cost,
            interpret=interpret,
        )(alpha, x_p, w_p, b_p, g_p, beta_p)

    return {"hidden": out_p[:, :h]}


def _reference(x, alpha, w_t, b, gamma, beta):
    """Pure-JAX f32 reference of the PyTorch forward (eval mode)."""
    num_layers = w_t.shape[0]
    for l in range(num_layers):
        y = x @ w_t[l] + b[l][None, :]
        y = jnp.where(y >= 0.0, y, alpha[l] * y)
        mean = jnp.mean(y, axis=-1, keepdims=True)
        var = jnp.mean((y - mean) ** 2, axis=-1, keepdims=True)
        y = (y - mean) * jax.lax.rsqrt(var + 1e-5)
        y = y * gamma[l][None, :] + beta[l][None, :]
        x = x + y
    return x


if __name__ == "__main__":
    num_hidden = 32
    num_layers = 2
    n_cells = 16

    key = jax.random.PRNGKey(0)
    k_x, k_w, k_b = jax.random.split(key, 3)

    x = jax.random.normal(k_x, (n_cells, num_hidden), dtype=jnp.float32)

    # nn.Linear init: U(-1/sqrt(in), 1/sqrt(in)); stored transposed (in, out).
    bound = 1.0 / float(num_hidden) ** 0.5
    w_t = jax.random.uniform(
        k_w, (num_layers, num_hidden, num_hidden), jnp.float32, -bound, bound
    )
    b = jax.random.uniform(
        k_b, (num_layers, num_hidden), jnp.float32, -bound, bound
    )
    alpha = jnp.full((num_layers,), 0.25, dtype=jnp.float32)    # nn.PReLU() default
    gamma = jnp.ones((num_layers, num_hidden), jnp.float32)     # LayerNorm weight
    beta = jnp.zeros((num_layers, num_hidden), jnp.float32)     # LayerNorm bias

    params = (alpha, w_t, b, gamma, beta)
    ref = _reference(x, alpha, w_t, b, gamma, beta)

    # Default path (weights VMEM-resident, Buffered(1) params).
    out = mlp_encoder({"h": x}, params)["hidden"]
    out = jax.block_until_ready(out)
    assert out.shape == (n_cells, num_hidden)
    assert bool(jnp.all(jnp.isfinite(out)))
    # bf16 matmul with f32 accumulation vs an all-f32 reference.
    assert jnp.allclose(out, ref, atol=2e-2, rtol=2e-2), float(
        jnp.max(jnp.abs(out - ref))
    )

    # Also exercise the weight-streaming fallback (used when L*Hp^2 won't fit VMEM).
    out_s = mlp_encoder({"h": x}, params, force_mode="stream")["hidden"]
    out_s = jax.block_until_ready(out_s)
    assert jnp.allclose(out_s, ref, atol=2e-2, rtol=2e-2), float(
        jnp.max(jnp.abs(out_s - ref))
    )

    print("KERNEL_OK")
</pallas_src>

<mosaic_0001>
module attributes {stable_mosaic.version = 11 : i64} {
  func.func @_resident_kernel(%arg0: i32, %arg1: memref<2xf32, #tpu.memory_space<smem>>, %arg2: memref<8x128xf32, #tpu.memory_space<vmem>>, %arg3: memref<2x128x128xbf16, #tpu.memory_space<vmem>>, %arg4: memref<2x1x128xf32, #tpu.memory_space<vmem>>, %arg5: memref<2x1x128xf32, #tpu.memory_space<vmem>>, %arg6: memref<2x1x128xf32, #tpu.memory_space<vmem>>, %arg7: memref<8x128xf32, #tpu.memory_space<vmem>>) attributes {dimension_semantics = [#tpu.dimension_semantics<parallel>], iteration_bounds = array<i64: 2>, scalar_prefetch = 0 : i64, scratch_operands = 0 : i64, tpu.core_type = #tpu.core_type<tc>, window_params = [{transform_indices = @transform_0, window_bounds = array<i64: 2>}, {transform_indices = @transform_1, window_bounds = array<i64: 8, 128>}, {pipeline_mode = #tpu.pipeline_mode<synchronous>, transform_indices = @transform_2, window_bounds = array<i64: 2, 128, 128>}, {pipeline_mode = #tpu.pipeline_mode<synchronous>, transform_indices = @transform_3, window_bounds = array<i64: 2, 1, 128>}, {pipeline_mode = #tpu.pipeline_mode<synchronous>, transform_indices = @transform_4, window_bounds = array<i64: 2, 1, 128>}, {pipeline_mode = #tpu.pipeline_mode<synchronous>, transform_indices = @transform_5, window_bounds = array<i64: 2, 1, 128>}, {transform_indices = @transform_6, window_bounds = array<i64: 8, 128>}]} {
    %c0 = arith.constant 0 : index
    %c0_0 = arith.constant 0 : index
    %0 = vector.load %arg2[%c0, %c0_0] : memref<8x128xf32, #tpu.memory_space<vmem>>, vector<8x128xf32>
    %c0_1 = arith.constant 0 : index
    %c0_2 = arith.constant 0 : index
    %c0_3 = arith.constant 0 : index
    %1 = vector.load %arg3[%c0_1, %c0_2, %c0_3] : memref<2x128x128xbf16, #tpu.memory_space<vmem>>, vector<1x128x128xbf16>
    %2 = vector.shape_cast %1 : vector<1x128x128xbf16> to vector<128x128xbf16>
    %c0_4 = arith.constant 0 : index
    %c0_5 = arith.constant 0 : index
    %c0_6 = arith.constant 0 : index
    %3 = vector.load %arg4[%c0_4, %c0_5, %c0_6] : memref<2x1x128xf32, #tpu.memory_space<vmem>>, vector<1x1x128xf32>
    %4 = vector.shape_cast %3 : vector<1x1x128xf32> to vector<1x128xf32>
    %c0_7 = arith.constant 0 : index
    %c0_8 = arith.constant 0 : index
    %c0_9 = arith.constant 0 : index
    %5 = vector.load %arg5[%c0_7, %c0_8, %c0_9] : memref<2x1x128xf32, #tpu.memory_space<vmem>>, vector<1x1x128xf32>
    %6 = vector.shape_cast %5 : vector<1x1x128xf32> to vector<1x128xf32>
    %c0_10 = arith.constant 0 : index
    %c0_11 = arith.constant 0 : index
    %c0_12 = arith.constant 0 : index
    %7 = vector.load %arg6[%c0_10, %c0_11, %c0_12] : memref<2x1x128xf32, #tpu.memory_space<vmem>>, vector<1x1x128xf32>
    %8 = vector.shape_cast %7 : vector<1x1x128xf32> to vector<1x128xf32>
    %c0_13 = arith.constant 0 : index
    %9 = memref.load %arg1[%c0_13] : memref<2xf32, #tpu.memory_space<smem>>
    %10 = arith.truncf %0 : vector<8x128xf32> to vector<8x128xbf16>
    %cst = arith.constant dense<0.000000e+00> : vector<8x128xf32>
    %11 = tpu.matmul %10, %2, %cst {dimension_numbers = #tpu.dot_dimension_numbers<[1], [0], [0], [1], [0, 0, 1, 1], [], []>} : vector<8x128xbf16>, vector<128x128xbf16>, vector<8x128xf32> -> vector<8x128xf32>
    %12 = vector.broadcast %4 : vector<1x128xf32> to vector<8x128xf32>
    %13 = arith.addf %11, %12 : vector<8x128xf32>
    %cst_14 = arith.constant 0.000000e+00 : f32
    %14 = vector.broadcast %cst_14 : f32 to vector<8x128xf32>
    %15 = arith.cmpf oge, %13, %14 : vector<8x128xf32>
    %16 = vector.broadcast %9 : f32 to vector<8x128xf32>
    %17 = arith.mulf %16, %13 : vector<8x128xf32>
    %18 = arith.select %15, %13, %17 : vector<8x128xi1>, vector<8x128xf32>
    %cst_15 = arith.constant dense<0.000000e+00> : vector<8xf32>
    %19 = vector.multi_reduction <add>, %18, %cst_15 [1] : vector<8x128xf32> to vector<8xf32>
    %20 = vector.shape_cast %19 : vector<8xf32> to vector<8x1xf32>
    %cst_16 = arith.constant 3.125000e-02 : f32
    %21 = vector.broadcast %cst_16 : f32 to vector<8x1xf32>
    %22 = arith.mulf %20, %21 : vector<8x1xf32>
    %23 = arith.mulf %18, %18 : vector<8x128xf32>
    %cst_17 = arith.constant dense<0.000000e+00> : vector<8xf32>
    %24 = vector.multi_reduction <add>, %23, %cst_17 [1] : vector<8x128xf32> to vector<8xf32>
    %25 = vector.shape_cast %24 : vector<8xf32> to vector<8x1xf32>
    %cst_18 = arith.constant 3.125000e-02 : f32
    %26 = vector.broadcast %cst_18 : f32 to vector<8x1xf32>
    %27 = arith.mulf %25, %26 : vector<8x1xf32>
    %28 = arith.mulf %22, %22 : vector<8x1xf32>
    %29 = arith.subf %27, %28 : vector<8x1xf32>
    %cst_19 = arith.constant 0.000000e+00 : f32
    %30 = vector.broadcast %cst_19 : f32 to vector<8x1xf32>
    %31 = arith.maximumf %29, %30 : vector<8x1xf32>
    %32 = vector.broadcast %22 : vector<8x1xf32> to vector<8x128xf32>
    %33 = arith.subf %18, %32 : vector<8x128xf32>
    %cst_20 = arith.constant 9.99999974E-6 : f32
    %34 = vector.broadcast %cst_20 : f32 to vector<8x1xf32>
    %35 = arith.addf %31, %34 : vector<8x1xf32>
    %36 = math.rsqrt %35 : vector<8x1xf32>
    %37 = vector.broadcast %36 : vector<8x1xf32> to vector<8x128xf32>
    %38 = arith.mulf %33, %37 : vector<8x128xf32>
    %39 = vector.broadcast %6 : vector<1x128xf32> to vector<8x128xf32>
    %40 = arith.mulf %38, %39 : vector<8x128xf32>
    %41 = vector.broadcast %8 : vector<1x128xf32> to vector<8x128xf32>
    %42 = arith.addf %40, %41 : vector<8x128xf32>
    %43 = arith.addf %0, %42 : vector<8x128xf32>
    %c1 = arith.constant 1 : index
    %c0_21 = arith.constant 0 : index
    %c0_22 = arith.constant 0 : index
    %44 = vector.load %arg3[%c1, %c0_21, %c0_22] : memref<2x128x128xbf16, #tpu.memory_space<vmem>>, vector<1x128x128xbf16>
    %45 = vector.shape_cast %44 : vector<1x128x128xbf16> to vector<128x128xbf16>
    %c1_23 = arith.constant 1 : index
    %c0_24 = arith.constant 0 : index
    %c0_25 = arith.constant 0 : index
    %46 = vector.load %arg4[%c1_23, %c0_24, %c0_25] : memref<2x1x128xf32, #tpu.memory_space<vmem>>, vector<1x1x128xf32>
    %47 = vector.shape_cast %46 : vector<1x1x128xf32> to vector<1x128xf32>
    %c1_26 = arith.constant 1 : index
    %c0_27 = arith.constant 0 : index
    %c0_28 = arith.constant 0 : index
    %48 = vector.load %arg5[%c1_26, %c0_27, %c0_28] : memref<2x1x128xf32, #tpu.memory_space<vmem>>, vector<1x1x128xf32>
    %49 = vector.shape_cast %48 : vector<1x1x128xf32> to vector<1x128xf32>
    %c1_29 = arith.constant 1 : index
    %c0_30 = arith.constant 0 : index
    %c0_31 = arith.constant 0 : index
    %50 = vector.load %arg6[%c1_29, %c0_30, %c0_31] : memref<2x1x128xf32, #tpu.memory_space<vmem>>, vector<1x1x128xf32>
    %51 = vector.shape_cast %50 : vector<1x1x128xf32> to vector<1x128xf32>
    %c1_32 = arith.constant 1 : index
    %52 = memref.load %arg1[%c1_32] : memref<2xf32, #tpu.memory_space<smem>>
    %53 = arith.truncf %43 : vector<8x128xf32> to vector<8x128xbf16>
    %cst_33 = arith.constant dense<0.000000e+00> : vector<8x128xf32>
    %54 = tpu.matmul %53, %45, %cst_33 {dimension_numbers = #tpu.dot_dimension_numbers<[1], [0], [0], [1], [0, 0, 1, 1], [], []>} : vector<8x128xbf16>, vector<128x128xbf16>, vector<8x128xf32> -> vector<8x128xf32>
    %55 = vector.broadcast %47 : vector<1x128xf32> to vector<8x128xf32>
    %56 = arith.addf %54, %55 : vector<8x128xf32>
    %cst_34 = arith.constant 0.000000e+00 : f32
    %57 = vector.broadcast %cst_34 : f32 to vector<8x128xf32>
    %58 = arith.cmpf oge, %56, %57 : vector<8x128xf32>
    %59 = vector.broadcast %52 : f32 to vector<8x128xf32>
    %60 = arith.mulf %59, %56 : vector<8x128xf32>
    %61 = arith.select %58, %56, %60 : vector<8x128xi1>, vector<8x128xf32>
    %cst_35 = arith.constant dense<0.000000e+00> : vector<8xf32>
    %62 = vector.multi_reduction <add>, %61, %cst_35 [1] : vector<8x128xf32> to vector<8xf32>
    %63 = vector.shape_cast %62 : vector<8xf32> to vector<8x1xf32>
    %cst_36 = arith.constant 3.125000e-02 : f32
    %64 = vector.broadcast %cst_36 : f32 to vector<8x1xf32>
    %65 = arith.mulf %63, %64 : vector<8x1xf32>
    %66 = arith.mulf %61, %61 : vector<8x128xf32>
    %cst_37 = arith.constant dense<0.000000e+00> : vector<8xf32>
    %67 = vector.multi_reduction <add>, %66, %cst_37 [1] : vector<8x128xf32> to vector<8xf32>
    %68 = vector.shape_cast %67 : vector<8xf32> to vector<8x1xf32>
    %cst_38 = arith.constant 3.125000e-02 : f32
    %69 = vector.broadcast %cst_38 : f32 to vector<8x1xf32>
    %70 = arith.mulf %68, %69 : vector<8x1xf32>
    %71 = arith.mulf %65, %65 : vector<8x1xf32>
    %72 = arith.subf %70, %71 : vector<8x1xf32>
    %cst_39 = arith.constant 0.000000e+00 : f32
    %73 = vector.broadcast %cst_39 : f32 to vector<8x1xf32>
    %74 = arith.maximumf %72, %73 : vector<8x1xf32>
    %75 = vector.broadcast %65 : vector<8x1xf32> to vector<8x128xf32>
    %76 = arith.subf %61, %75 : vector<8x128xf32>
    %cst_40 = arith.constant 9.99999974E-6 : f32
    %77 = vector.broadcast %cst_40 : f32 to vector<8x1xf32>
    %78 = arith.addf %74, %77 : vector<8x1xf32>
    %79 = math.rsqrt %78 : vector<8x1xf32>
    %80 = vector.broadcast %79 : vector<8x1xf32> to vector<8x128xf32>
    %81 = arith.mulf %76, %80 : vector<8x128xf32>
    %82 = vector.broadcast %49 : vector<1x128xf32> to vector<8x128xf32>
    %83 = arith.mulf %81, %82 : vector<8x128xf32>
    %84 = vector.broadcast %51 : vector<1x128xf32> to vector<8x128xf32>
    %85 = arith.addf %83, %84 : vector<8x128xf32>
    %86 = arith.addf %43, %85 : vector<8x128xf32>
    %c0_41 = arith.constant 0 : index
    %c0_42 = arith.constant 0 : index
    %87 = vector.load %arg7[%c0_41, %c0_42] : memref<8x128xf32, #tpu.memory_space<vmem>>, vector<8x128xf32>
    tpu.vector_store %arg7[%c0_41, %c0_42], %86 {strides = array<i32>} : memref<8x128xf32, #tpu.memory_space<vmem>>, vector<8x128xf32>,
    return
  }
  func.func @transform_0(%arg0: i32) -> i32 {
    %c0_i32 = arith.constant 0 : i32
    %c0_i32_0 = arith.constant 0 : i32
    return %c0_i32 : i32
  }
  func.func @transform_1(%arg0: i32) -> (i32, i32) {
    %c0_i32 = arith.constant 0 : i32
    %c0_i32_0 = arith.constant 0 : i32
    return %arg0, %c0_i32 : i32, i32
  }
  func.func @transform_2(%arg0: i32) -> (i32, i32, i32) {
    %c0_i32 = arith.constant 0 : i32
    %c0_i32_0 = arith.constant 0 : i32
    %c0_i32_1 = arith.constant 0 : i32
    %c0_i32_2 = arith.constant 0 : i32
    return %c0_i32, %c0_i32_0, %c0_i32_1 : i32, i32, i32
  }
  func.func @transform_3(%arg0: i32) -> (i32, i32, i32) {
    %c0_i32 = arith.constant 0 : i32
    %c0_i32_0 = arith.constant 0 : i32
    %c0_i32_1 = arith.constant 0 : i32
    %c0_i32_2 = arith.constant 0 : i32
    return %c0_i32, %c0_i32_0, %c0_i32_1 : i32, i32, i32
  }
  func.func @transform_4(%arg0: i32) -> (i32, i32, i32) {
    %c0_i32 = arith.constant 0 : i32
    %c0_i32_0 = arith.constant 0 : i32
    %c0_i32_1 = arith.constant 0 : i32
    %c0_i32_2 = arith.constant 0 : i32
    return %c0_i32, %c0_i32_0, %c0_i32_1 : i32, i32, i32
  }
  func.func @transform_5(%arg0: i32) -> (i32, i32, i32) {
    %c0_i32 = arith.constant 0 : i32
    %c0_i32_0 = arith.constant 0 : i32
    %c0_i32_1 = arith.constant 0 : i32
    %c0_i32_2 = arith.constant 0 : i32
    return %c0_i32, %c0_i32_0, %c0_i32_1 : i32, i32, i32
  }
  func.func @transform_6(%arg0: i32) -> (i32, i32) {
    %c0_i32 = arith.constant 0 : i32
    %c0_i32_0 = arith.constant 0 : i32
    return %arg0, %c0_i32 : i32, i32
  }
}

</mosaic_0001>

<llo_original>
// kernel: tpu_custom_call.1
$region0: #{tpu_custom_call.1}
  #allocation0 [shape = 'u32[]', space=smem, size = 0x4, offset = 0x4, fixed_abs, tag = 'smem constant byte address 0x4 - core index']
  #allocation1 [shape = 'u32[144,128]{1,0:T(1,128)}', space=vmem, size = 0x12000, scoped, tag = 'internal scratch']
  %s0 = inlined_call_operand.hbm [shape: f32[2], index: 0, kind: input, shape index: {}]
  %s1 = inlined_call_operand.hbm [shape: f32[16,128], index: 1, kind: input, shape index: {}]
  %s2 = inlined_call_operand.hbm [shape: bf16[2,128,128], index: 2, kind: input, shape index: {}]
  %s3 = inlined_call_operand.vmem [shape: f32[2,1,128], index: 3, kind: input, shape index: {}]
  %s4 = inlined_call_operand.vmem [shape: f32[2,1,128], index: 4, kind: input, shape index: {}]
  %s5 = inlined_call_operand.vmem [shape: f32[2,1,128], index: 5, kind: input, shape index: {}]
  %s6 = inlined_call_operand.hbm [shape: f32[16,128], index: 6, kind: output, shape index: {}]
  %s7 = sld [smem:[#allocation0]]
  $region69: #{tpu_custom_call.1} parent=0
    _
  %s9 = ssub.s32 1, %s7
  %s10 = scalar_select 0, %s9, %s7
  $region1: #{tpu_custom_call.1} parent=0
    #allocation2 [shape = 'u8[512]{0}', space=smem, size = 0x200, scoped, tag = 'input window, operand 0, single buffered']
    #allocation3 [shape = 's32[2]{0}', space=sflag, size = 0x8, scoped, tag = 'scoped memory for tpu_custom_call.1']
    #allocation4 [shape = 's32[2]{0}', space=sflag, size = 0x8, scoped, tag = 'scoped memory for tpu_custom_call.1']
    #allocation5 [shape = 's32[2]{0}', space=sflag, size = 0x8, scoped, tag = 'scoped memory for tpu_custom_call.1']
    #allocation6 [shape = 'u8[8192]{0}', space=vmem, size = 0x2000, scoped, tag = 'input window, operand 1']
    #allocation7 [shape = 'u8[65536]{0}', space=vmem, size = 0x10000, scoped, tag = 'input window, operand 2, single buffered']
    #allocation8 [shape = 's32[1]{0}', space=sflag, size = 0x4, scoped, tag = 'scoped memory for tpu_custom_call.1']
    #allocation9 [shape = 'u8[8192]{0}', space=vmem, size = 0x2000, scoped, tag = 'output window, operand 0']
    %11 = vsyncpa [#allocation5], 0
    %12 = vsyncpa [#allocation3], 0
    %s13 = scalar_lea.sflag [#allocation3], 1
    %14 = vsyncpa %s13, 0
    %15 = vsyncpa [#allocation8], 0
    %16 = vsyncpa [#allocation4], 0
    %s17 = scalar_lea.sflag [#allocation4], 1
    %18 = vsyncpa %s17, 0
    loop: start=0, step=1, limit=4
    $region2: #{tpu_custom_call.1} parent=1 // loop_pre_header
      _
    $region3: #{tpu_custom_call.1} parent=1 // loop_header
      %s20 = sphi 0, %s24
      %p21 = scmp.ge.s32.totalorder %s20, 4
      %s28 = sphi 0, %s28
      %s30 = sphi 0, %s28
      %s31 = sphi 0, %s30
      %s45 = sphi 0, %s31
      %s51 = sphi 0, %s53
      %s54 = sphi 0, %s51
      %s55 = sphi 0, %s54
      %s71 = sphi 0, %s55
      %s75 = sphi 0, %s75
      %s77 = sphi 0, %s75
      %s78 = sphi 0, %s77
      %s92 = sphi 0, %s78
      %s96 = sphi 0, %s96
      %s98 = sphi 0, %s96
      %s99 = sphi 0, %s98
      %s113 = sphi 0, %s99
      %s117 = sphi 0, %s117
      %s119 = sphi 0, %s117
      %s120 = sphi 0, %s119
      %s134 = sphi 0, %s120
      %s138 = sphi 0, %s138
      %s140 = sphi 0, %s138
      %s141 = sphi 0, %s140
      %s155 = sphi 0, %s141
      %s161 = sphi 0, %s163
      %s164 = sphi 0, %s161
      %s165 = sphi 0, %s164
      %s181 = sphi 0, %s165
    $region4: #{tpu_custom_call.1} parent=1 // loop_header_branch
      %23 = sbr.rel (%p21) target = $region8
    $region5: #{tpu_custom_call.1} parent=1 // loop_body
      %s25 = ssub.s32 %s20, 1
      %s26 = ssub.s32 %s20, 2
      %s27 = sadd.s32 %s20, 1
      %s29 = sadd.s32 %s28, 1
      %p32 = scmp.eq.s32.totalorder %s20, 1
      %p33 = scmp.ne.s32.totalorder %s28, %s30
      %p34 = scmp.eq.s32.totalorder %s20, 0
      %p35 = por %p33, %p34
      %p36 = scmp.ne.s32.totalorder %s28, %s30
      %p37 = scmp.eq.s32.totalorder %s25, 1
      %p38 = por %p36, %p37
      %p39 = scmp.ne.s32.totalorder %s30, %s31
      %p40 = scmp.eq.s32.totalorder %s25, 0
      %p41 = por %p39, %p40
      %p42 = scmp.ne.s32.totalorder %s30, %s31
      %p43 = scmp.eq.s32.totalorder %s26, 1
      %p44 = por %p42, %p43
      %p46 = scmp.ne.s32.totalorder %s31, %s45
      %p47 = scmp.eq.s32.totalorder %s26, 0
      %p48 = por %p46, %p47
      %s49 = ssub.s32 %s20, %s27
      %p50 = scmp.eq.s32.totalorder %s49, 0
      %s52 = sadd.s32 %s51, 1
      %s53 = scalar_select %p50, %s51, %s52
      %p56 = pneg %p50
      %p57 = scmp.eq.s32.totalorder %s20, 1
      %p58 = por %p56, %p57
      %p59 = scmp.ne.s32.totalorder %s51, %s54
      %p60 = scmp.eq.s32.totalorder %s20, 0
      %p61 = por %p59, %p60
      %p62 = scmp.ne.s32.totalorder %s51, %s54
      %p63 = scmp.eq.s32.totalorder %s25, 1
      %p64 = por %p62, %p63
      %p65 = scmp.ne.s32.totalorder %s54, %s55
      %p66 = scmp.eq.s32.totalorder %s25, 0
      %p67 = por %p65, %p66
      %p68 = scmp.ne.s32.totalorder %s54, %s55
      %p69 = scmp.eq.s32.totalorder %s26, 1
      %p70 = por %p68, %p69
      %p72 = scmp.ne.s32.totalorder %s55, %s71
      %p73 = scmp.eq.s32.totalorder %s26, 0
      %p74 = por %p72, %p73
      %s76 = sadd.s32 %s75, 1
      %p79 = scmp.eq.s32.totalorder %s20, 1
      %p80 = scmp.ne.s32.totalorder %s75, %s77
      %p81 = scmp.eq.s32.totalorder %s20, 0
      %p82 = por %p80, %p81
      %p83 = scmp.ne.s32.totalorder %s75, %s77
      %p84 = scmp.eq.s32.totalorder %s25, 1
      %p85 = por %p83, %p84
      %p86 = scmp.ne.s32.totalorder %s77, %s78
      %p87 = scmp.eq.s32.totalorder %s25, 0
      %p88 = por %p86, %p87
      %p89 = scmp.ne.s32.totalorder %s77, %s78
      %p90 = scmp.eq.s32.totalorder %s26, 1
      %p91 = por %p89, %p90
      %p93 = scmp.ne.s32.totalorder %s78, %s92
      %p94 = scmp.eq.s32.totalorder %s26, 0
      %p95 = por %p93, %p94
      %s97 = sadd.s32 %s96, 1
      %p100 = scmp.eq.s32.totalorder %s20, 1
      %p101 = scmp.ne.s32.totalorder %s96, %s98
      %p102 = scmp.eq.s32.totalorder %s20, 0
      %p103 = por %p101, %p102
      %p104 = scmp.ne.s32.totalorder %s96, %s98
      %p105 = scmp.eq.s32.totalorder %s25, 1
      %p106 = por %p104, %p105
      %p107 = scmp.ne.s32.totalorder %s98, %s99
      %p108 = scmp.eq.s32.totalorder %s25, 0
      %p109 = por %p107, %p108
      %p110 = scmp.ne.s32.totalorder %s98, %s99
      %p111 = scmp.eq.s32.totalorder %s26, 1
      %p112 = por %p110, %p111
      %p114 = scmp.ne.s32.totalorder %s99, %s113
      %p115 = scmp.eq.s32.totalorder %s26, 0
      %p116 = por %p114, %p115
      %s118 = sadd.s32 %s117, 1
      %p121 = scmp.eq.s32.totalorder %s20, 1
      %p122 = scmp.ne.s32.totalorder %s117, %s119
      %p123 = scmp.eq.s32.totalorder %s20, 0
      %p124 = por %p122, %p123
      %p125 = scmp.ne.s32.totalorder %s117, %s119
      %p126 = scmp.eq.s32.totalorder %s25, 1
      %p127 = por %p125, %p126
      %p128 = scmp.ne.s32.totalorder %s119, %s120
      %p129 = scmp.eq.s32.totalorder %s25, 0
      %p130 = por %p128, %p129
      %p131 = scmp.ne.s32.totalorder %s119, %s120
      %p132 = scmp.eq.s32.totalorder %s26, 1
      %p133 = por %p131, %p132
      %p135 = scmp.ne.s32.totalorder %s120, %s134
      %p136 = scmp.eq.s32.totalorder %s26, 0
      %p137 = por %p135, %p136
      %s139 = sadd.s32 %s138, 1
      %p142 = scmp.eq.s32.totalorder %s20, 1
      %p143 = scmp.ne.s32.totalorder %s138, %s140
      %p144 = scmp.eq.s32.totalorder %s20, 0
      %p145 = por %p143, %p144
      %p146 = scmp.ne.s32.totalorder %s138, %s140
      %p147 = scmp.eq.s32.totalorder %s25, 1
      %p148 = por %p146, %p147
      %p149 = scmp.ne.s32.totalorder %s140, %s141
      %p150 = scmp.eq.s32.totalorder %s25, 0
      %p151 = por %p149, %p150
      %p152 = scmp.ne.s32.totalorder %s140, %s141
      %p153 = scmp.eq.s32.totalorder %s26, 1
      %p154 = por %p152, %p153
      %p156 = scmp.ne.s32.totalorder %s141, %s155
      %p157 = scmp.eq.s32.totalorder %s26, 0
      %p158 = por %p156, %p157
      %s159 = ssub.s32 %s20, %s27
      %p160 = scmp.eq.s32.totalorder %s159, 0
      %s162 = sadd.s32 %s161, 1
      %s163 = scalar_select %p160, %s161, %s162
      %p166 = pneg %p160
      %p167 = scmp.eq.s32.totalorder %s20, 1
      %p168 = por %p166, %p167
      %p169 = scmp.ne.s32.totalorder %s161, %s164
      %p170 = scmp.eq.s32.totalorder %s20, 0
      %p171 = por %p169, %p170
      %p172 = scmp.ne.s32.totalorder %s161, %s164
      %p173 = scmp.eq.s32.totalorder %s25, 1
      %p174 = por %p172, %p173
      %p175 = scmp.ne.s32.totalorder %s164, %s165
      %p176 = scmp.eq.s32.totalorder %s25, 0
      %p177 = por %p175, %p176
      %p178 = scmp.ne.s32.totalorder %s164, %s165
      %p179 = scmp.eq.s32.totalorder %s26, 1
      %p180 = por %p178, %p179
      %p182 = scmp.ne.s32.totalorder %s165, %s181
      %p183 = scmp.eq.s32.totalorder %s26, 0
      %p184 = por %p182, %p183
      %p185 = scmp.le.s32.totalorder 1, %s20
      %p186 = scmp.lt.s32.totalorder %s20, 3
      %p187 = pnand %p185, %p186
      %p188 = pneg %p187
      // Predicated region
      $region9: #{tpu_custom_call.1} parent=5 // pred_check
        _
      $region10: #{tpu_custom_call.1} parent=5 // pred_check_branch
        %190 = sbr.rel (%p187) target = $region12
      $region11: #{tpu_custom_call.1} parent=5 // pred_region
        %s191 = ssub.s32 %s20, 1
        // Predicated region
        $region13: #{tpu_custom_call.1} parent=11 // pred_check
          %p192 = pneg %p41
        $region14: #{tpu_custom_call.1} parent=11 // pred_check_branch
          %194 = sbr.rel (%p192) target = $region16
        $region15: #{tpu_custom_call.1} parent=11 // pred_region
          %s196 = ssub.s32 16, 16
          %197 = vsyncadd [#allocation5], %s196
          %200 = dma.hbm_to_smem %s0, 16, [#allocation2], [#allocation5]
        $region16: #{tpu_custom_call.1} parent=11 // pred_fallthru
          _
        // Predicated region
        $region17: #{tpu_custom_call.1} parent=11 // pred_check
          %p201 = pneg %p88
        $region18: #{tpu_custom_call.1} parent=11 // pred_check_branch
          %203 = sbr.rel (%p201) target = $region20
        $region19: #{tpu_custom_call.1} parent=11 // pred_region
          %s205 = ssub.s32 2048, 2048
          %206 = vsyncadd [#allocation8], %s205
          %s207 = sshll.u32 [#allocation7], 4
          %s208 = int_to_ptr.vmem [resolvable:$true] %s207
          %213 = dma.hbm_to_vmem [thread:$0]  %s2, 2048, %s208, [#allocation8], 64, 64, 4
        $region20: #{tpu_custom_call.1} parent=11 // pred_fallthru
          _
        // Predicated region
        $region21: #{tpu_custom_call.1} parent=11 // pred_check
          %p214 = pneg %p109
        $region22: #{tpu_custom_call.1} parent=11 // pred_check_branch
          %216 = sbr.rel (%p214) target = $region24
        $region23: #{tpu_custom_call.1} parent=11 // pred_region
          _
        $region24: #{tpu_custom_call.1} parent=11 // pred_fallthru
          _
        // Predicated region
        $region25: #{tpu_custom_call.1} parent=11 // pred_check
          %p217 = pneg %p130
        $region26: #{tpu_custom_call.1} parent=11 // pred_check_branch
          %219 = sbr.rel (%p217) target = $region28
        $region27: #{tpu_custom_call.1} parent=11 // pred_region
          _
        $region28: #{tpu_custom_call.1} parent=11 // pred_fallthru
          _
        // Predicated region
        $region29: #{tpu_custom_call.1} parent=11 // pred_check
          %p220 = pneg %p151
        $region30: #{tpu_custom_call.1} parent=11 // pred_check_branch
          %222 = sbr.rel (%p220) target = $region32
        $region31: #{tpu_custom_call.1} parent=11 // pred_region
          _
        $region32: #{tpu_custom_call.1} parent=11 // pred_fallthru
          _
      $region12: #{tpu_custom_call.1} parent=5 // pred_fallthru
        _
      %p223 = scmp.lt.s32.totalorder %s20, 2
      // Predicated region
      $region33: #{tpu_custom_call.1} parent=5 // pred_check
        %p224 = pneg %p223
      $region34: #{tpu_custom_call.1} parent=5 // pred_check_branch
        %226 = sbr.rel (%p224) target = $region36
      $region35: #{tpu_custom_call.1} parent=5 // pred_region
        // Predicated region
        $region37: #{tpu_custom_call.1} parent=35 // pred_check
          %p227 = pneg %p61
        $region38: #{tpu_custom_call.1} parent=35 // pred_check_branch
          %229 = sbr.rel (%p227) target = $region40
        $region39: #{tpu_custom_call.1} parent=35 // pred_region
          %s230 = sand.u32 %s51, 1
          %s231 = scalar_lea.sflag [#allocation3], %s230
          %s232 = sand.u32 %s51, 1
          %s233 = smul.addr %s232, 8
          %s234 = scalar_lea.vmem [#allocation6], %s233
          %s236 = ssub.s32 128, 128
          %237 = vsyncadd %s231, %s236
          %s238 = smul.addr %s20, 128
          %s239 = scalar_lea.hbm %s1, %s238
          %s241 = sshll.u32 %s234, 4
          %s242 = int_to_ptr.vmem [resolvable:$true] %s241
          %244 = dma.hbm_to_vmem [thread:$0]  %s239, 128, %s242, %s231
        $region40: #{tpu_custom_call.1} parent=35 // pred_fallthru
          _
      $region36: #{tpu_custom_call.1} parent=5 // pred_fallthru
        _
      %p245 = scmp.le.s32.totalorder 1, %s20
      %p246 = scmp.lt.s32.totalorder %s20, 3
      %p247 = pnand %p245, %p246
      %p248 = pneg %p247
      // Predicated region
      $region41: #{tpu_custom_call.1} parent=5 // pred_check
        _
      $region42: #{tpu_custom_call.1} parent=5 // pred_check_branch
        %250 = sbr.rel (%p247) target = $region44
      $region43: #{tpu_custom_call.1} parent=5 // pred_region
        %s251 = ssub.s32 %s20, 1
        // Predicated region
        $region45: #{tpu_custom_call.1} parent=43 // pred_check
          %p252 = pneg %p41
        $region46: #{tpu_custom_call.1} parent=43 // pred_check_branch
          %254 = sbr.rel (%p252) target = $region48
        $region47: #{tpu_custom_call.1} parent=43 // pred_region
          %255 = dma.done [#allocation5], 16
        $region48: #{tpu_custom_call.1} parent=43 // pred_fallthru
          _
        %s256 = sand.u32 %s54, 1
        %s257 = scalar_lea.sflag [#allocation3], %s256
        %s258 = sand.u32 %s54, 1
        %s259 = smul.addr %s258, 8
        %s260 = scalar_lea.vmem [#allocation6], %s259
        // Predicated region
        $region49: #{tpu_custom_call.1} parent=43 // pred_check
          %p261 = pneg %p67
        $region50: #{tpu_custom_call.1} parent=43 // pred_check_branch
          %263 = sbr.rel (%p261) target = $region52
        $region51: #{tpu_custom_call.1} parent=43 // pred_region
          %264 = dma.done %s257, 128
        $region52: #{tpu_custom_call.1} parent=43 // pred_fallthru
          _
        // Predicated region
        $region53: #{tpu_custom_call.1} parent=43 // pred_check
          %p265 = pneg %p88
        $region54: #{tpu_custom_call.1} parent=43 // pred_check_branch
          %267 = sbr.rel (%p265) target = $region56
        $region55: #{tpu_custom_call.1} parent=43 // pred_region
          %268 = dma.done [#allocation8], 2048
        $region56: #{tpu_custom_call.1} parent=43 // pred_fallthru
          _
        %269 = sfence
        %p270 = pneg %p41
        %p271 = pneg %p38
        %s272 = sand.u32 %s54, 1
        %s273 = scalar_lea.sflag [#allocation3], %s272
        %s274 = sand.u32 %s54, 1
        %s275 = smul.addr %s274, 8
        %s276 = scalar_lea.vmem [#allocation6], %s275
        %p277 = pneg %p67
        %p278 = pneg %p64
        %p279 = pneg %p88
        %p280 = pneg %p85
        %p281 = pneg %p109
        %p282 = pneg %p106
        %p283 = pneg %p130
        %p284 = pneg %p127
        %p285 = pneg %p151
        %p286 = pneg %p148
        %p287 = pneg %p177
        %p288 = pneg %p174
        %s289 = sand.u32 %s164, 1
        %s290 = scalar_lea.sflag [#allocation4], %s289
        %s291 = sand.u32 %s164, 1
        %s292 = smul.addr %s291, 8
        %s293 = scalar_lea.vmem [#allocation9], %s292
        %v295 = vld [vmem:[%s260] sm:$0xff]
        %v296 = vld [vmem:[#allocation7] sm:$0xf]
        %v297 = vld [vmem:[#allocation7 + $0x4] sm:$0xf]
        %v298 = vld [vmem:[#allocation7 + $0x8] sm:$0xf]
        %v299 = vld [vmem:[#allocation7 + $0xc] sm:$0xf]
        %v300 = vld [vmem:[#allocation7 + $0x10] sm:$0xf]
        %v301 = vld [vmem:[#allocation7 + $0x14] sm:$0xf]
        %v302 = vld [vmem:[#allocation7 + $0x18] sm:$0xf]
        %v303 = vld [vmem:[#allocation7 + $0x1c] sm:$0xf]
        %v304 = vld [vmem:[#allocation7 + $0x20] sm:$0xf]
        %v305 = vld [vmem:[#allocation7 + $0x24] sm:$0xf]
        %v306 = vld [vmem:[#allocation7 + $0x28] sm:$0xf]
        %v307 = vld [vmem:[#allocation7 + $0x2c] sm:$0xf]
        %v308 = vld [vmem:[#allocation7 + $0x30] sm:$0xf]
        %v309 = vld [vmem:[#allocation7 + $0x34] sm:$0xf]
        %v310 = vld [vmem:[#allocation7 + $0x38] sm:$0xf]
        %v311 = vld [vmem:[#allocation7 + $0x3c] sm:$0xf]
        %v312 = vld [vmem:[%s3] sm:$0x1]
        %v313 = vld [vmem:[%s4] sm:$0x1]
        %v314 = vld [vmem:[%s5] sm:$0x1]
        %s315 = sld [smem:[#allocation2]]
        %v316 = vpack.c.bf16 %v295, %v295
        %v318 = vlaneseq
        %v319 = vshrl.u32 %v318, 7
        %v320 = vsub.s32 0, %v319
        %v321 = vrot.slane %v312, %v320
        %v339 = vunpack.c.l.b16 %v296
        %v340 = vunpack.c.l.b16 %v297
        %v341 = vunpack.c.l.b16 %v298
        %v342 = vunpack.c.l.b16 %v299
        %v343 = vunpack.c.l.b16 %v300
        %v344 = vunpack.c.l.b16 %v301
        %v345 = vunpack.c.l.b16 %v302
        %v346 = vunpack.c.l.b16 %v303
        %v347 = vunpack.c.l.b16 %v304
        %v348 = vunpack.c.l.b16 %v305
        %v349 = vunpack.c.l.b16 %v306
        %v350 = vunpack.c.l.b16 %v307
        %v351 = vunpack.c.l.b16 %v308
        %v352 = vunpack.c.l.b16 %v309
        %v353 = vunpack.c.l.b16 %v310
        %v354 = vunpack.c.l.b16 %v311
        %v355 = vpack.c.b16 %v340, %v339
        %v356 = vpack.c.b16 %v342, %v341
        %v357 = vpack.c.b16 %v344, %v343
        %v358 = vpack.c.b16 %v346, %v345
        %v359 = vpack.c.b16 %v348, %v347
        %v360 = vpack.c.b16 %v350, %v349
        %v361 = vpack.c.b16 %v352, %v351
        %v362 = vpack.c.b16 %v354, %v353
        %371 = vmatprep.subr.bf16.mxu0 0
        %372 = vmatpush1.bf16.msra.mxu0 %v355
        %373 = vmatprep.subr.bf16.mxu0 0
        %374 = vmatpush1.bf16.msra.mxu0 %v356
        %375 = vmatprep.subr.bf16.mxu0 0
        %376 = vmatpush1.bf16.msra.mxu0 %v357
        %377 = vmatprep.subr.bf16.mxu0 0
        %378 = vmatpush1.bf16.msra.mxu0 %v358
        %379 = vmatprep.subr.bf16.mxu0 0
        %380 = vmatpush1.bf16.msra.mxu0 %v359
        %381 = vmatprep.subr.bf16.mxu0 0
        %382 = vmatpush1.bf16.msra.mxu0 %v360
        %383 = vmatprep.subr.bf16.mxu0 0
        %384 = vmatpush1.bf16.msra.mxu0 %v361
        %385 = vmatprep.subr.bf16.mxu0 0
        %386 = vmatpush1.bf16.msra.mxu0 %v362
        %387 = vmatprep.subr.bf16.mxu0 0
        %388 = vmatpush1.bf16.msra.mxu0 0
        %389 = vmatprep.subr.bf16.mxu0 0
        %390 = vmatpush1.bf16.msra.mxu0 0
        %391 = vmatprep.subr.bf16.mxu0 0
        %392 = vmatpush1.bf16.msra.mxu0 0
        %393 = vmatprep.subr.bf16.mxu0 0
        %394 = vmatpush1.bf16.msra.mxu0 0
        %395 = vmatprep.subr.bf16.mxu0 0
        %396 = vmatpush1.bf16.msra.mxu0 0
        %397 = vmatprep.subr.bf16.mxu0 0
        %398 = vmatpush1.bf16.msra.mxu0 0
        %399 = vmatprep.subr.bf16.mxu0 0
        %400 = vmatpush1.bf16.msra.mxu0 0
        %401 = vmatprep.subr.bf16.mxu0 0
        %402 = vmatpush1.bf16.msra.mxu0 0
        %403 = vmatprep.mubr.bf16.mxu0 0
        %404 = vmatmul.mubr.bf16.gmra.mrb[0].mxu0 %v316
        %v405 = vpop.f32.mrb[0].mxu0
        %v406 = vadd.f32 %v321, %v405
        %v407 = vpop.f32.mrb[0].mxu0
        %v408 = vpop.f32.mrb[0].mxu0
        %v409 = vpop.f32.mrb[0].mxu0
        %410 = vdwg.mxu0
        %vm411 = vcmp.ge.f32.partialorder %v406, 0.0
        %v412 = vstv %s315
        %v413 = vmul.f32 %v412, %v406
        %v414 = vsel %vm411, %v406, %v413
        %415 = vadd.xlane.f32.xlu0 %v414
        %v416 = vpop.xlane.xlu0 %415
        %v417 = vmul.f32 %v416, 0.03125
        %v418 = vmul.f32 %v414, %v414
        %419 = vadd.xlane.f32.xlu0 %v418
        %v420 = vpop.xlane.xlu0 %419
        %v421 = vmul.f32 %v420, 0.03125
        %v422 = vmul.f32 %v417, %v417
        %v423 = vsub.f32 %v421, %v422
        %v424 = vmax.f32 %v423, 0.0
        %v425 = vsub.f32 %v414, %v417
        %v426 = vadd.f32 %v424, 1e-05
        %v427 = vrsqrt.pop %v426
        %v428 = vmul.f32 %v425, %v427
        %v430 = vlaneseq
        %v431 = vshrl.u32 %v430, 7
        %v432 = vsub.s32 0, %v431
        %v433 = vrot.slane %v313, %v432
        %v435 = vmul.f32 %v428, %v433
        %v437 = vlaneseq
        %v438 = vshrl.u32 %v437, 7
        %v439 = vsub.s32 0, %v438
        %v440 = vrot.slane %v314, %v439
        %v442 = vadd.f32 %v435, %v440
        %v443 = vadd.f32 %v295, %v442
        %s444 = scalar_lea.vmem [#allocation7], 64
        %v445 = vld [vmem:[%s444] sm:$0xf]
        %v446 = vld [vmem:[%s444 + $0x4] sm:$0xf]
        %v447 = vld [vmem:[%s444 + $0x8] sm:$0xf]
        %v448 = vld [vmem:[%s444 + $0xc] sm:$0xf]
        %v449 = vld [vmem:[%s444 + $0x10] sm:$0xf]
        %v450 = vld [vmem:[%s444 + $0x14] sm:$0xf]
        %v451 = vld [vmem:[%s444 + $0x18] sm:$0xf]
        %v452 = vld [vmem:[%s444 + $0x1c] sm:$0xf]
        %v453 = vld [vmem:[%s444 + $0x20] sm:$0xf]
        %v454 = vld [vmem:[%s444 + $0x24] sm:$0xf]
        %v455 = vld [vmem:[%s444 + $0x28] sm:$0xf]
        %v456 = vld [vmem:[%s444 + $0x2c] sm:$0xf]
        %v457 = vld [vmem:[%s444 + $0x30] sm:$0xf]
        %v458 = vld [vmem:[%s444 + $0x34] sm:$0xf]
        %v459 = vld [vmem:[%s444 + $0x38] sm:$0xf]
        %v460 = vld [vmem:[%s444 + $0x3c] sm:$0xf]
        %s461 = scalar_lea.vmem %s3, 1
        %v462 = vld [vmem:[%s461] sm:$0x1]
        %s463 = scalar_lea.vmem %s4, 1
        %v464 = vld [vmem:[%s463] sm:$0x1]
        %s465 = scalar_lea.vmem %s5, 1
        %v466 = vld [vmem:[%s465] sm:$0x1]
        %s467 = sld [smem:[#allocation2 + $0x1]]
        %v468 = vpack.c.bf16 %v443, %v443
        %v470 = vlaneseq
        %v471 = vshrl.u32 %v470, 7
        %v472 = vsub.s32 0, %v471
        %v473 = vrot.slane %v462, %v472
        %v491 = vunpack.c.l.b16 %v445
        %v492 = vunpack.c.l.b16 %v446
        %v493 = vunpack.c.l.b16 %v447
        %v494 = vunpack.c.l.b16 %v448
        %v495 = vunpack.c.l.b16 %v449
        %v496 = vunpack.c.l.b16 %v450
        %v497 = vunpack.c.l.b16 %v451
        %v498 = vunpack.c.l.b16 %v452
        %v499 = vunpack.c.l.b16 %v453
        %v500 = vunpack.c.l.b16 %v454
        %v501 = vunpack.c.l.b16 %v455
        %v502 = vunpack.c.l.b16 %v456
        %v503 = vunpack.c.l.b16 %v457
        %v504 = vunpack.c.l.b16 %v458
        %v505 = vunpack.c.l.b16 %v459
        %v506 = vunpack.c.l.b16 %v460
        %v507 = vpack.c.b16 %v492, %v491
        %v508 = vpack.c.b16 %v494, %v493
        %v509 = vpack.c.b16 %v496, %v495
        %v510 = vpack.c.b16 %v498, %v497
        %v511 = vpack.c.b16 %v500, %v499
        %v512 = vpack.c.b16 %v502, %v501
        %v513 = vpack.c.b16 %v504, %v503
        %v514 = vpack.c.b16 %v506, %v505
        %523 = vmatprep.subr.bf16.mxu0 0
        %524 = vmatpush1.bf16.msra.mxu0 %v507
        %525 = vmatprep.subr.bf16.mxu0 0
        %526 = vmatpush1.bf16.msra.mxu0 %v508
        %527 = vmatprep.subr.bf16.mxu0 0
        %528 = vmatpush1.bf16.msra.mxu0 %v509
        %529 = vmatprep.subr.bf16.mxu0 0
        %530 = vmatpush1.bf16.msra.mxu0 %v510
        %531 = vmatprep.subr.bf16.mxu0 0
        %532 = vmatpush1.bf16.msra.mxu0 %v511
        %533 = vmatprep.subr.bf16.mxu0 0
        %534 = vmatpush1.bf16.msra.mxu0 %v512
        %535 = vmatprep.subr.bf16.mxu0 0
        %536 = vmatpush1.bf16.msra.mxu0 %v513
        %537 = vmatprep.subr.bf16.mxu0 0
        %538 = vmatpush1.bf16.msra.mxu0 %v514
        %539 = vmatprep.subr.bf16.mxu0 0
        %540 = vmatpush1.bf16.msra.mxu0 0
        %541 = vmatprep.subr.bf16.mxu0 0
        %542 = vmatpush1.bf16.msra.mxu0 0
        %543 = vmatprep.subr.bf16.mxu0 0
        %544 = vmatpush1.bf16.msra.mxu0 0
        %545 = vmatprep.subr.bf16.mxu0 0
        %546 = vmatpush1.bf16.msra.mxu0 0
        %547 = vmatprep.subr.bf16.mxu0 0
        %548 = vmatpush1.bf16.msra.mxu0 0
        %549 = vmatprep.subr.bf16.mxu0 0
        %550 = vmatpush1.bf16.msra.mxu0 0
        %551 = vmatprep.subr.bf16.mxu0 0
        %552 = vmatpush1.bf16.msra.mxu0 0
        %553 = vmatprep.subr.bf16.mxu0 0
        %554 = vmatpush1.bf16.msra.mxu0 0
        %555 = vmatprep.mubr.bf16.mxu0 0
        %556 = vmatmul.mubr.bf16.gmra.mrb[0].mxu0 %v468
        %v557 = vpop.f32.mrb[0].mxu0
        %v558 = vadd.f32 %v473, %v557
        %v559 = vpop.f32.mrb[0].mxu0
        %v560 = vpop.f32.mrb[0].mxu0
        %v561 = vpop.f32.mrb[0].mxu0
        %562 = vdwg.mxu0
        %vm563 = vcmp.ge.f32.partialorder %v558, 0.0
        %v564 = vstv %s467
        %v565 = vmul.f32 %v564, %v558
        %v566 = vsel %vm563, %v558, %v565
        %567 = vadd.xlane.f32.xlu0 %v566
        %v568 = vpop.xlane.xlu0 %567
        %v569 = vmul.f32 %v568, 0.03125
        %v570 = vmul.f32 %v566, %v566
        %571 = vadd.xlane.f32.xlu0 %v570
        %v572 = vpop.xlane.xlu0 %571
        %v573 = vmul.f32 %v572, 0.03125
        %v574 = vmul.f32 %v569, %v569
        %v575 = vsub.f32 %v573, %v574
        %v576 = vmax.f32 %v575, 0.0
        %v577 = vsub.f32 %v566, %v569
        %v578 = vadd.f32 %v576, 1e-05
        %v579 = vrsqrt.pop %v578
        %v580 = vmul.f32 %v577, %v579
        %v582 = vlaneseq
        %v583 = vshrl.u32 %v582, 7
        %v584 = vsub.s32 0, %v583
        %v585 = vrot.slane %v464, %v584
        %v587 = vmul.f32 %v580, %v585
        %v589 = vlaneseq
        %v590 = vshrl.u32 %v589, 7
        %v591 = vsub.s32 0, %v590
        %v592 = vrot.slane %v466, %v591
        %v594 = vadd.f32 %v587, %v592
        %v595 = vadd.f32 %v443, %v594
        %596 = vst [vmem:[%s293] sm:$0xff] %v595
        %s597 = sand.u32 %s164, 1
        %s598 = scalar_lea.sflag [#allocation4], %s597
        %s599 = sand.u32 %s164, 1
        %s600 = smul.addr %s599, 8
        %s601 = scalar_lea.vmem [#allocation9], %s600
        // Predicated region
        $region57: #{tpu_custom_call.1} parent=43 // pred_check
          %p602 = pneg %p174
        $region58: #{tpu_custom_call.1} parent=43 // pred_check_branch
          %604 = sbr.rel (%p602) target = $region60
        $region59: #{tpu_custom_call.1} parent=43 // pred_region
          %s606 = ssub.s32 128, 128
          %607 = vsyncadd %s598, %s606
          %s608 = smul.addr %s25, 128
          %s609 = scalar_lea.hbm %s6, %s608
          %s611 = sshll.u32 %s601, 4
          %s612 = int_to_ptr.vmem [resolvable:$true] %s611
          %614 = dma.vmem_to_hbm [thread:$0]  %s612, 128, %s609, %s598
        $region60: #{tpu_custom_call.1} parent=43 // pred_fallthru
          _
      $region44: #{tpu_custom_call.1} parent=5 // pred_fallthru
        _
      %p615 = scmp.le.s32.totalorder 2, %s20
      // Predicated region
      $region61: #{tpu_custom_call.1} parent=5 // pred_check
        %p616 = pneg %p615
      $region62: #{tpu_custom_call.1} parent=5 // pred_check_branch
        %618 = sbr.rel (%p616) target = $region64
      $region63: #{tpu_custom_call.1} parent=5 // pred_region
        %s619 = ssub.s32 %s20, 2
        // Predicated region
        $region65: #{tpu_custom_call.1} parent=63 // pred_check
          %p620 = pneg %p180
        $region66: #{tpu_custom_call.1} parent=63 // pred_check_branch
          %622 = sbr.rel (%p620) target = $region68
        $region67: #{tpu_custom_call.1} parent=63 // pred_region
          %s623 = sand.u32 %s165, 1
          %s624 = scalar_lea.sflag [#allocation4], %s623
          %s625 = sand.u32 %s165, 1
          %s626 = smul.addr %s625, 8
          %s627 = scalar_lea.vmem [#allocation9], %s626
          %628 = dma.done %s624, 128
        $region68: #{tpu_custom_call.1} parent=63 // pred_fallthru
          _
      $region64: #{tpu_custom_call.1} parent=5 // pred_fallthru
        _
    $region6: #{tpu_custom_call.1} parent=1 // loop_footer
      %s24 = sadd.s32 1, %s20
    $region7: #{tpu_custom_call.1} parent=1 // loop_footer_branch
      %19 = sbr.rel target = $region3
    $region8: #{tpu_custom_call.1} parent=1 // loop_exit
      _
    %629 = vsyncpa [#allocation3], 1
    %s630 = scalar_lea.sflag [#allocation3], 1
    %631 = vsyncpa %s630, 1
    %632 = vsyncpa [#allocation8], 1
    %633 = vsyncpa [#allocation4], 1
    %s634 = scalar_lea.sflag [#allocation4], 1
    %635 = vsyncpa %s634, 1
    %636 = vsyncpa [#allocation5], 1
    %s637 = scalar_lea.sflag [#allocation5], 1
    %638 = vsyncpa %s637, 1

</llo_original>
